<compile_context>
chip_gen: v5e
topology: v5e:2x2
jax: 0.10.0
libtpu: 0.0.40
codegen_flags: <defaults>
</compile_context>

<pallas_src>
import functools

import jax
import jax.numpy as jnp
from jax import lax
from jax.experimental import pallas as pl
from jax.experimental.pallas import tpu as pltpu


def _round_up(n, m):
    return ((n + m - 1) // m) * m


def timesiren_kernel(x_ref, w1_ref, w2_ref, b2_ref, o_ref, *, row_chunk):
    # x_ref : (TB, K)    input tile (K = input_dim, tiny for a time embedding)
    # w1_ref: (K, Ep)    lin1 weight, pre-transposed, hidden dim lane-padded, f32
    # w2_ref: (Ep, E)    lin2 weight, pre-transposed, padded rows = 0, bf16/f32
    # b2_ref: (1, E)     lin2 bias, f32
    # o_ref : (TB, E)    output tile (UNPADDED last dim)
    w1 = w1_ref[...].astype(jnp.float32)      # keep the sin argument in f32
    w2 = w2_ref[...]                          # bf16 (default) or f32
    b2 = b2_ref[...].astype(jnp.float32)
    k_dim = w1.shape[0]

    def chunk(c):
        if isinstance(c, int):
            r0 = c * row_chunk
        else:
            r0 = pl.multiple_of(c * row_chunk, row_chunk)
        x = x_ref[pl.ds(r0, row_chunk), :].astype(jnp.float32)      # (rc, K)

        if k_dim <= 8:
            # K is far below the MXU systolic depth -> cheaper as VPU
            # multiply-adds (statically unrolled outer products).
            h = x[:, 0:1] * w1[0:1, :]
            for k in range(1, k_dim):
                h = h + x[:, k:k + 1] * w1[k:k + 1, :]
        else:
            h = jnp.dot(x.astype(w2.dtype), w1.astype(w2.dtype),
                        preferred_element_type=jnp.float32)

        # sin in f32 regardless of I/O / MXU dtype (v5e has no bf16 VPU/EUP).
        h = jnp.sin(h)

        # Layer 2 on the MXU: bf16 operands by default (single-pass matmul),
        # f32 accumulation; bias add in f32.
        out = jnp.dot(h.astype(w2.dtype), w2,
                      preferred_element_type=jnp.float32) + b2
        o_ref[pl.ds(r0, row_chunk), :] = out.astype(o_ref.dtype)

    n_chunks = x_ref.shape[0] // row_chunk
    if n_chunks <= 1:
        chunk(0)
    else:
        # Row-chunked so the live h slab stays small (bounded live range via
        # fori_loop rather than a static Python loop).
        def body(c, carry):
            chunk(c)
            return carry
        lax.fori_loop(0, n_chunks, body, 0)


def prepare_params(w1, w2, b2, *, lane=128, compute_dtype=jnp.bfloat16):
    """One-time parameter prep (PyTorch layout in, kernel layout out).

    w1 (emb, K)   -> (K, Ep)  f32, hidden dim zero-padded to a lane multiple
                     (padded columns give sin(0) = 0, so valid outputs are
                     unchanged).
    w2 (emb, emb) -> (Ep, emb) in compute_dtype (bf16 default: single-pass MXU,
                     half the resident VMEM / HBM read).  Padded rows are 0.
    b2 (emb,)     -> (1, emb) f32.
    The OUTPUT dim is left unpadded so the kernel never writes padded columns
    to HBM."""
    emb_dim, input_dim = w1.shape
    ep = _round_up(emb_dim, lane)
    w1_t = jnp.zeros((input_dim, ep), jnp.float32)
    w1_t = w1_t.at[:, :emb_dim].set(w1.T.astype(jnp.float32))
    w2_t = jnp.zeros((ep, emb_dim), compute_dtype)
    w2_t = w2_t.at[:emb_dim, :].set(w2.T.astype(compute_dtype))
    b2_p = b2.astype(jnp.float32).reshape(1, emb_dim)
    return w1_t, w2_t, b2_p, emb_dim


def time_siren_prepared(x, w1_t, w2_t, b2_p, emb_dim, *,
                        block_rows=512, row_chunk=128,
                        io_dtype=None, out_dtype=None):
    """x: (B, input_dim) -> (B, emb_dim) in out_dtype (default x.dtype).

    For large batches on HBM-writeback-bound chips (v5e / v6e) pass
    io_dtype=out_dtype=jnp.bfloat16 to halve the dominant output stream;
    in-kernel elementwise math stays f32."""
    if io_dtype is not None:
        x = x.astype(io_dtype)
    b, input_dim = x.shape
    ep = w1_t.shape[1]
    out_dtype = jnp.dtype(out_dtype) if out_dtype is not None else jnp.dtype(x.dtype)

    # ---- batch-tile selection --------------------------------------------
    # Multiple of 8 sublanes; big enough to amortize the ~0.35us/step grid
    # overhead, but split into >=2 steps when the batch allows it so the
    # "parallel" axis actually shards across both v7x TensorCores.
    tb = min(block_rows, _round_up(b, 8))
    tb = min(tb, max(8, _round_up(pl.cdiv(b, 2), 8)))

    # VMEM cap: double-buffered x / out tiles + resident weights + live h.
    vmem_budget = 12 << 20
    w_bytes = 2 * (w1_t.size * w1_t.dtype.itemsize
                   + w2_t.size * w2_t.dtype.itemsize
                   + b2_p.size * b2_p.dtype.itemsize)
    per_row = (2 * input_dim * jnp.dtype(x.dtype).itemsize       # x (dbl-buffered)
               + 2 * emb_dim * out_dtype.itemsize                # out (dbl-buffered)
               + ep * 4)                                         # live h slab
    tb_cap = max(8, ((vmem_budget - w_bytes) // per_row) // 8 * 8)
    tb = min(tb, tb_cap)
    if tb > row_chunk:
        tb = (tb // row_chunk) * row_chunk   # kernel chunk loop needs tb % rc == 0
    rc = min(row_chunk, tb)
    grid = (pl.cdiv(b, tb),)

    cost = pl.CostEstimate(
        flops=2 * b * (input_dim * ep + ep * emb_dim),
        transcendentals=b * ep,              # sin (lowers to a VPU polynomial)
        bytes_accessed=int(b * input_dim * jnp.dtype(x.dtype).itemsize
                           + b * emb_dim * out_dtype.itemsize
                           + w1_t.size * w1_t.dtype.itemsize
                           + w2_t.size * w2_t.dtype.itemsize
                           + b2_p.size * b2_p.dtype.itemsize))

    compiler_kwargs = dict(dimension_semantics=("parallel",))
    est_vmem = w_bytes + tb * per_row
    if est_vmem > (16 << 20):
        # Only triggered if a caller raises block_rows past the default budget.
        compiler_kwargs["vmem_limit_bytes"] = int(min(est_vmem + (4 << 20), 64 << 20))

    return pl.pallas_call(
        functools.partial(timesiren_kernel, row_chunk=rc),
        out_shape=jax.ShapeDtypeStruct((b, emb_dim), out_dtype),
        grid=grid,
        in_specs=[
            pl.BlockSpec((tb, input_dim), lambda i: (i, 0)),   # x: tiled over batch
            # Resident operands: constant index maps -> DMA'd once, stay in VMEM.
            pl.BlockSpec((input_dim, ep), lambda i: (0, 0)),   # w1
            pl.BlockSpec((ep, emb_dim), lambda i: (0, 0)),     # w2
            pl.BlockSpec((1, emb_dim), lambda i: (0, 0)),      # b2
        ],
        out_specs=pl.BlockSpec((tb, emb_dim), lambda i: (i, 0)),  # unpadded output
        compiler_params=pltpu.CompilerParams(**compiler_kwargs),
        cost_estimate=cost,
    )(x, w1_t, w2_t, b2_p)


def time_siren(x, w1, w2, b2, *, compute_dtype=jnp.bfloat16, **kwargs):
    """Convenience wrapper matching the PyTorch parameter layout:
       w1: (emb_dim, input_dim), w2: (emb_dim, emb_dim), b2: (emb_dim,).
       compute_dtype=jnp.float32 reproduces PyTorch f32 semantics exactly;
       the bf16 default is the fast single-pass-MXU path (~1e-2 abs drift)."""
    w1_t, w2_t, b2_p, emb_dim = prepare_params(w1, w2, b2,
                                               compute_dtype=compute_dtype)
    return time_siren_prepared(x, w1_t, w2_t, b2_p, emb_dim, **kwargs)


def init_params(key, input_dim, emb_dim, dtype=jnp.float32):
    """Deterministic synthetic init matching PyTorch Linear shapes."""
    k1, k2, k3 = jax.random.split(key, 3)
    w1 = jax.random.normal(k1, (emb_dim, input_dim), dtype) * 0.5
    w2 = jax.random.normal(k2, (emb_dim, emb_dim), dtype) * 0.1
    b2 = jax.random.normal(k3, (emb_dim,), dtype) * 0.1
    return w1, w2, b2


def reference(x, w1, w2, b2):
    h = jnp.sin(jnp.dot(x, w1.T, precision=lax.Precision.HIGHEST))
    return jnp.dot(h, w2.T, precision=lax.Precision.HIGHEST) + b2


if __name__ == "__main__":
    key = jax.random.PRNGKey(0)
    kx, kp, kx2, kp2 = jax.random.split(key, 4)

    # --- Test 1: tiny shapes, exact f32 path (matches PyTorch semantics) ----
    batch, input_dim, emb_dim = 8, 4, 32
    x = jax.random.normal(kx, (batch, input_dim), jnp.float32)
    w1, w2, b2 = init_params(kp, input_dim, emb_dim)
    ref = reference(x, w1, w2, b2)

    out_exact = time_siren(x, w1, w2, b2, compute_dtype=jnp.float32)
    jax.block_until_ready(out_exact)
    assert out_exact.shape == (batch, emb_dim)
    assert jnp.allclose(out_exact, ref, atol=1e-4, rtol=1e-4)

    # Default fast path: bf16 MXU operands for layer 2 (f32 accumulation).
    out_fast = time_siren(x, w1, w2, b2)
    jax.block_until_ready(out_fast)
    assert out_fast.shape == (batch, emb_dim)
    assert jnp.allclose(out_fast, ref, atol=5e-2, rtol=5e-2)

    # --- Test 2: multi-step grid + in-kernel row chunking + bf16 output -----
    batch2, input_dim2, emb_dim2 = 600, 1, 128
    x2 = jax.random.normal(kx2, (batch2, input_dim2), jnp.float32)
    w1b, w2b, b2b = init_params(kp2, input_dim2, emb_dim2)
    ref2 = reference(x2, w1b, w2b, b2b)

    out2 = time_siren(x2, w1b, w2b, b2b, out_dtype=jnp.bfloat16)
    jax.block_until_ready(out2)
    assert out2.shape == (batch2, emb_dim2)
    assert out2.dtype == jnp.bfloat16
    assert jnp.allclose(out2.astype(jnp.float32), ref2, atol=5e-2, rtol=5e-2)

    print("KERNEL_OK")
</pallas_src>

<mosaic_0001>
module attributes {stable_mosaic.version = 11 : i64} {
  func.func @timesiren_kernel(%arg0: i32, %arg1: memref<8x4xf32, #tpu.memory_space<vmem>>, %arg2: memref<4x128xf32, #tpu.memory_space<vmem>>, %arg3: memref<128x32xf32, #tpu.memory_space<vmem>>, %arg4: memref<1x32xf32, #tpu.memory_space<vmem>>, %arg5: memref<8x32xf32, #tpu.memory_space<vmem>>) attributes {dimension_semantics = [#tpu.dimension_semantics<parallel>], iteration_bounds = array<i64: 1>, scalar_prefetch = 0 : i64, scratch_operands = 0 : i64, tpu.core_type = #tpu.core_type<tc>, window_params = [{transform_indices = @transform_0, window_bounds = array<i64: 8, 4>}, {pipeline_mode = #tpu.pipeline_mode<synchronous>, transform_indices = @transform_1, window_bounds = array<i64: 4, 128>}, {pipeline_mode = #tpu.pipeline_mode<synchronous>, transform_indices = @transform_2, window_bounds = array<i64: 128, 32>}, {pipeline_mode = #tpu.pipeline_mode<synchronous>, transform_indices = @transform_3, window_bounds = array<i64: 1, 32>}, {transform_indices = @transform_4, window_bounds = array<i64: 8, 32>}]} {
    %c0 = arith.constant 0 : index
    %c0_0 = arith.constant 0 : index
    %0 = vector.load %arg2[%c0, %c0_0] : memref<4x128xf32, #tpu.memory_space<vmem>>, vector<4x128xf32>
    %c0_1 = arith.constant 0 : index
    %c0_2 = arith.constant 0 : index
    %1 = vector.load %arg3[%c0_1, %c0_2] : memref<128x32xf32, #tpu.memory_space<vmem>>, vector<128x32xf32>
    %c0_3 = arith.constant 0 : index
    %c0_4 = arith.constant 0 : index
    %2 = vector.load %arg4[%c0_3, %c0_4] : memref<1x32xf32, #tpu.memory_space<vmem>>, vector<1x32xf32>
    %c0_5 = arith.constant 0 : index
    %c0_6 = arith.constant 0 : index
    %3 = vector.load %arg1[%c0_5, %c0_6] : memref<8x4xf32, #tpu.memory_space<vmem>>, vector<8x4xf32>
    %4 = vector.extract_strided_slice %3 {offsets = [0, 0], sizes = [8, 1], strides = [1, 1]} : vector<8x4xf32> to vector<8x1xf32>
    %5 = vector.extract_strided_slice %0 {offsets = [0, 0], sizes = [1, 128], strides = [1, 1]} : vector<4x128xf32> to vector<1x128xf32>
    %6 = vector.broadcast %4 : vector<8x1xf32> to vector<8x128xf32>
    %7 = vector.broadcast %5 : vector<1x128xf32> to vector<8x128xf32>
    %8 = arith.mulf %6, %7 : vector<8x128xf32>
    %9 = vector.extract_strided_slice %3 {offsets = [0, 1], sizes = [8, 1], strides = [1, 1]} : vector<8x4xf32> to vector<8x1xf32>
    %10 = vector.extract_strided_slice %0 {offsets = [1, 0], sizes = [1, 128], strides = [1, 1]} : vector<4x128xf32> to vector<1x128xf32>
    %11 = vector.broadcast %9 : vector<8x1xf32> to vector<8x128xf32>
    %12 = vector.broadcast %10 : vector<1x128xf32> to vector<8x128xf32>
    %13 = arith.mulf %11, %12 : vector<8x128xf32>
    %14 = arith.addf %8, %13 : vector<8x128xf32>
    %15 = vector.extract_strided_slice %3 {offsets = [0, 2], sizes = [8, 1], strides = [1, 1]} : vector<8x4xf32> to vector<8x1xf32>
    %16 = vector.extract_strided_slice %0 {offsets = [2, 0], sizes = [1, 128], strides = [1, 1]} : vector<4x128xf32> to vector<1x128xf32>
    %17 = vector.broadcast %15 : vector<8x1xf32> to vector<8x128xf32>
    %18 = vector.broadcast %16 : vector<1x128xf32> to vector<8x128xf32>
    %19 = arith.mulf %17, %18 : vector<8x128xf32>
    %20 = arith.addf %14, %19 : vector<8x128xf32>
    %21 = vector.extract_strided_slice %3 {offsets = [0, 3], sizes = [8, 1], strides = [1, 1]} : vector<8x4xf32> to vector<8x1xf32>
    %22 = vector.extract_strided_slice %0 {offsets = [3, 0], sizes = [1, 128], strides = [1, 1]} : vector<4x128xf32> to vector<1x128xf32>
    %23 = vector.broadcast %21 : vector<8x1xf32> to vector<8x128xf32>
    %24 = vector.broadcast %22 : vector<1x128xf32> to vector<8x128xf32>
    %25 = arith.mulf %23, %24 : vector<8x128xf32>
    %26 = arith.addf %20, %25 : vector<8x128xf32>
    %27 = math.sin %26 : vector<8x128xf32>
    %cst = arith.constant dense<0.000000e+00> : vector<8x32xf32>
    %28 = tpu.matmul %27, %1, %cst {dimension_numbers = #tpu.dot_dimension_numbers<[1], [0], [0], [1], [0, 0, 1, 1], [], []>} : vector<8x128xf32>, vector<128x32xf32>, vector<8x32xf32> -> vector<8x32xf32>
    %29 = vector.broadcast %2 : vector<1x32xf32> to vector<8x32xf32>
    %30 = arith.addf %28, %29 : vector<8x32xf32>
    %c0_7 = arith.constant 0 : index
    %c0_8 = arith.constant 0 : index
    %31 = vector.load %arg5[%c0_7, %c0_8] : memref<8x32xf32, #tpu.memory_space<vmem>>, vector<8x32xf32>
    tpu.vector_store %arg5[%c0_7, %c0_8], %30 {strides = array<i32>} : memref<8x32xf32, #tpu.memory_space<vmem>>, vector<8x32xf32>,
    return
  }
  func.func @transform_0(%arg0: i32) -> (i32, i32) {
    %c0_i32 = arith.constant 0 : i32
    %c0_i32_0 = arith.constant 0 : i32
    return %arg0, %c0_i32 : i32, i32
  }
  func.func @transform_1(%arg0: i32) -> (i32, i32) {
    %c0_i32 = arith.constant 0 : i32
    %c0_i32_0 = arith.constant 0 : i32
    %c0_i32_1 = arith.constant 0 : i32
    return %c0_i32, %c0_i32_0 : i32, i32
  }
  func.func @transform_2(%arg0: i32) -> (i32, i32) {
    %c0_i32 = arith.constant 0 : i32
    %c0_i32_0 = arith.constant 0 : i32
    %c0_i32_1 = arith.constant 0 : i32
    return %c0_i32, %c0_i32_0 : i32, i32
  }
  func.func @transform_3(%arg0: i32) -> (i32, i32) {
    %c0_i32 = arith.constant 0 : i32
    %c0_i32_0 = arith.constant 0 : i32
    %c0_i32_1 = arith.constant 0 : i32
    return %c0_i32, %c0_i32_0 : i32, i32
  }
  func.func @transform_4(%arg0: i32) -> (i32, i32) {
    %c0_i32 = arith.constant 0 : i32
    %c0_i32_0 = arith.constant 0 : i32
    return %arg0, %c0_i32 : i32, i32
  }
}

</mosaic_0001>

<llo_original>
// kernel: tpu_custom_call.1
$region0: #{tpu_custom_call.1}
  #allocation0 [shape = 'u32[]', space=smem, size = 0x4, offset = 0x4, fixed_abs, tag = 'smem constant byte address 0x4 - core index']
  #allocation1 [shape = 'u32[72,128]{1,0:T(1,128)}', space=vmem, size = 0x9000, scoped, tag = 'internal scratch']
  %s0 = inlined_call_operand.vmem [shape: f32[8,4], index: 0, kind: input, shape index: {}]
  %s1 = inlined_call_operand.vmem [shape: f32[4,128], index: 1, kind: input, shape index: {}]
  %s2 = inlined_call_operand.vmem [shape: f32[128,32], index: 2, kind: input, shape index: {}]
  %s3 = inlined_call_operand.vmem [shape: f32[1,32], index: 3, kind: input, shape index: {}]
  %s4 = inlined_call_operand.hbm [shape: f32[8,32], index: 4, kind: output, shape index: {}]
  %s5 = sld [smem:[#allocation0]]
  $region26: #{tpu_custom_call.1} parent=0
    _
  %s7 = ssub.s32 1, %s5
  %s8 = scalar_select 0, %s7, %s5
  $region1: #{tpu_custom_call.1} parent=0
    #allocation2 [shape = 'u8[4096]{0}', space=vmem, size = 0x1000, scoped, tag = 'output window, operand 0, single buffered']
    #allocation3 [shape = 's32[1]{0}', space=sflag, size = 0x4, scoped, tag = 'scoped memory for tpu_custom_call.1']
    %9 = vsyncpa [#allocation3], 0
    // Predicated region
    $region2: #{tpu_custom_call.1} parent=1 // pred_check
      _
    $region3: #{tpu_custom_call.1} parent=1 // pred_check_branch
      %11 = sbr.rel (0) target = $region5
    $region4: #{tpu_custom_call.1} parent=1 // pred_region
      _
    $region5: #{tpu_custom_call.1} parent=1 // pred_fallthru
      _
    // Predicated region
    $region6: #{tpu_custom_call.1} parent=1 // pred_check
      _
    $region7: #{tpu_custom_call.1} parent=1 // pred_check_branch
      %13 = sbr.rel (0) target = $region9
    $region8: #{tpu_custom_call.1} parent=1 // pred_region
      _
    $region9: #{tpu_custom_call.1} parent=1 // pred_fallthru
      _
    // Predicated region
    $region10: #{tpu_custom_call.1} parent=1 // pred_check
      _
    $region11: #{tpu_custom_call.1} parent=1 // pred_check_branch
      %15 = sbr.rel (0) target = $region13
    $region12: #{tpu_custom_call.1} parent=1 // pred_region
      _
    $region13: #{tpu_custom_call.1} parent=1 // pred_fallthru
      _
    // Predicated region
    $region14: #{tpu_custom_call.1} parent=1 // pred_check
      _
    $region15: #{tpu_custom_call.1} parent=1 // pred_check_branch
      %17 = sbr.rel (0) target = $region17
    $region16: #{tpu_custom_call.1} parent=1 // pred_region
      _
    $region17: #{tpu_custom_call.1} parent=1 // pred_fallthru
      _
    %v18 = vld [vmem:[%s1] sm:$0xf]
    %v19 = vld [vmem:[%s2] sm:$0xff]
    %v20 = vld [vmem:[%s2 + $0x8] sm:$0xff]
    %v21 = vld [vmem:[%s2 + $0x10] sm:$0xff]
    %v22 = vld [vmem:[%s2 + $0x18] sm:$0xff]
    %v23 = vld [vmem:[%s2 + $0x20] sm:$0xff]
    %v24 = vld [vmem:[%s2 + $0x28] sm:$0xff]
    %v25 = vld [vmem:[%s2 + $0x30] sm:$0xff]
    %v26 = vld [vmem:[%s2 + $0x38] sm:$0xff]
    %v27 = vld [vmem:[%s2 + $0x40] sm:$0xff]
    %v28 = vld [vmem:[%s2 + $0x48] sm:$0xff]
    %v29 = vld [vmem:[%s2 + $0x50] sm:$0xff]
    %v30 = vld [vmem:[%s2 + $0x58] sm:$0xff]
    %v31 = vld [vmem:[%s2 + $0x60] sm:$0xff]
    %v32 = vld [vmem:[%s2 + $0x68] sm:$0xff]
    %v33 = vld [vmem:[%s2 + $0x70] sm:$0xff]
    %v34 = vld [vmem:[%s2 + $0x78] sm:$0xff]
    %v35 = vld [vmem:[%s3] sm:$0x1]
    %v36 = vld [vmem:[%s0] sm:$0xff]
    %38 = vset.pattern.permute.xlu0 0
    %39 = vperm.xlu0 %38, %v36
    %v40 = vpop.permute.xlu0 %39
    %v42 = vperm.slane %v18, 0
    %v43 = vmul.f32 %v40, %v42
    %44 = vset.pattern.permute.xlu0 1
    %45 = vperm.xlu0 %44, %v36
    %v46 = vpop.permute.xlu0 %45
    %v48 = vperm.slane %v18, 1
    %v49 = vmul.f32 %v46, %v48
    %v50 = vadd.f32 %v43, %v49
    %51 = vset.pattern.permute.xlu0 2
    %52 = vperm.xlu0 %51, %v36
    %v53 = vpop.permute.xlu0 %52
    %v55 = vperm.slane %v18, 2
    %v56 = vmul.f32 %v53, %v55
    %v57 = vadd.f32 %v50, %v56
    %58 = vset.pattern.permute.xlu0 3
    %59 = vperm.xlu0 %58, %v36
    %v60 = vpop.permute.xlu0 %59
    %v62 = vperm.slane %v18, 3
    %v63 = vmul.f32 %v60, %v62
    %v64 = vadd.f32 %v57, %v63
    %v65 = vand.u32 2147483647, %v64
    %vm66 = vcmp.le.f32.partialorder %v65, 0.7853982
    %vm67 = vcmp.lt.s32.totalorder %v64, 0
    %v68 = vand.u32 %v64, 2139095040
    %v69 = vshrl.u32 %v68, 23
    %v70 = vsub.s32 %v69, 127
    %v71 = vand.u32 2147483647, %v64
    %v72 = vand.u32 %v71, 8388607
    %v73 = vor.u32 %v72, 8388608
    %v74 = vsub.s32 0, %v73
    %v75 = vadd.s32 %v70, 1
    %vm76 = vcmp.gt.s32.totalorder %v75, 0
    %v77 = vsel %vm76, %v75, 0
    %v78 = vshrl.u32 %v77, 5
    %v79 = vand.u32 %v77, 31
    %v80 = vsub.s32 32, %v79
    %v81 = vshrl.u32 683565275, %v80
    %v82 = vshll.u32 683565275, %v79
    %v83 = vshrl.u32 2475754826, %v80
    %v84 = vor.u32 %v82, %v83
    %v85 = vshll.u32 2475754826, %v79
    %v86 = vshrl.u32 2131351028, %v80
    %v87 = vor.u32 %v85, %v86
    %v88 = vshll.u32 2131351028, %v79
    %v89 = vshrl.u32 2102212464, %v80
    %v90 = vor.u32 %v88, %v89
    %v91 = vshll.u32 2102212464, %v79
    %v92 = vshrl.u32 920167782, %v80
    %v93 = vor.u32 %v91, %v92
    %v94 = vshll.u32 920167782, %v79
    %v95 = vshrl.u32 1326507024, %v80
    %v96 = vor.u32 %v94, %v95
    %vm97 = vcmp.lt.s32.totalorder %v78, 1
    %vm98 = vcmp.lt.s32.totalorder %v78, 2
    %vm99 = vcmp.lt.s32.totalorder %v78, 3
    %vm100 = vcmp.lt.s32.totalorder %v78, 4
    %v101 = vsel %vm97, %v81, %v84
    %v102 = vsel %vm100, %v90, 2102212464
    %v103 = vsel %vm99, %v87, %v102
    %v104 = vsel %vm98, %v101, %v103
    %v105 = vsel %vm97, %v84, %v87
    %v106 = vsel %vm100, %v93, 920167782
    %v107 = vsel %vm99, %v90, %v106
    %v108 = vsel %vm98, %v105, %v107
    %v109 = vsel %vm97, %v87, %v90
    %v110 = vsel %vm100, %v96, 1326507024
    %v111 = vsel %vm99, %v93, %v110
    %v112 = vsel %vm98, %v109, %v111
    %v113 = vshll.u32 %v73, 8
    %v114 = vand.u32 %v113, 65535
    %v115 = vshrl.u32 %v113, 16
    %v116 = vand.u32 %v112, 65535
    %v117 = vshrl.u32 %v112, 16
    %v118 = vmul.u32 %v114, %v116
    %v119 = vmul.u32 %v114, %v117
    %v120 = vmul.u32 %v115, %v116
    %v121 = vmul.u32 %v115, %v117
    %v122 = vshll.u32 %v119, 16
    %v123 = vshrl.u32 %v119, 16
    %v124 = vshll.u32 %v120, 16
    %v125 = vshrl.u32 %v120, 16
    %vm126 = vc.u32 %v118, %v122
    %v127 = vsel %vm126, 1, 0
    %v128 = vadd.s32 %v118, %v122
    %v129 = vadd.s32 %v121, %v127
    %vm130 = vc.u32 %v128, %v124
    %v131 = vsel %vm130, 1, 0
    %v132 = vadd.s32 %v128, %v124
    %v133 = vadd.s32 %v129, %v131
    %v134 = vadd.s32 %v133, %v123
    %v135 = vadd.s32 %v134, %v125
    %v136 = vand.u32 %v113, 65535
    %v137 = vshrl.u32 %v113, 16
    %v138 = vand.u32 %v108, 65535
    %v139 = vshrl.u32 %v108, 16
    %v140 = vmul.u32 %v136, %v138
    %v141 = vmul.u32 %v136, %v139
    %v142 = vmul.u32 %v137, %v138
    %v143 = vmul.u32 %v137, %v139
    %v144 = vshll.u32 %v141, 16
    %v145 = vshrl.u32 %v141, 16
    %v146 = vshll.u32 %v142, 16
    %v147 = vshrl.u32 %v142, 16
    %vm148 = vc.u32 %v140, %v144
    %v149 = vsel %vm148, 1, 0
    %v150 = vadd.s32 %v140, %v144
    %v151 = vadd.s32 %v143, %v149
    %vm152 = vc.u32 %v150, %v146
    %v153 = vsel %vm152, 1, 0
    %v154 = vadd.s32 %v150, %v146
    %v155 = vadd.s32 %v151, %v153
    %v156 = vadd.s32 %v155, %v145
    %v157 = vadd.s32 %v156, %v147
    %v158 = vmul.u32 %v113, %v104
    %v159 = vadd.s32 %v135, %v154
    %vm160 = vc.u32 %v135, %v154
    %v161 = vadd.s32 %v157, 1
    %v162 = vsel %vm160, %v161, %v157
    %v163 = vadd.s32 %v158, %v162
    %v164 = vadd.s32 %v163, 536870912
    %v165 = vshrl.u32 %v164, 30
    %v166 = vshll.u32 %v165, 30
    %v167 = vsub.s32 %v163, %v166
    %vm168 = vcmp.lt.s32.totalorder %v167, 0
    %v169 = vsub.s32 0, %v167
    %v170 = vsel %vm168, %v169, %v167
    %v171 = vclz %v170
    %v172 = vsub.s32 %v171, 2
    %vm173 = vcmp.gt.s32.totalorder 0, %v172
    %v174 = vsel %vm173, 0, %v172
    %v175 = vsub.s32 32, %v174
    %v176 = vshll.u32 %v167, %v174
    %v177 = vshrl.u32 %v159, %v175
    %v178 = vor.u32 %v176, %v177
    %v179 = vsub.s32 4294967266, %v174
    %v180 = vadd.s32 %v179, 127
    %v181 = vshll.u32 %v180, 23
    %v182 = vor.u32 4788187, %v181
    %v183 = vand.u32 2147483647, %v182
    %v185 = vcvt.s32.f32 %v178
    %v186 = vmul.f32 %v185, %v183
    %v187 = vxor.u32 %v186, 2147483648
    %v188 = vsel %vm67, %v187, %v186
    %v189 = vsub.s32 4, %v165
    %v190 = vsel %vm67, %v189, %v165
    %v191 = vsel %vm66, %v64, %v188
    %v192 = vsel %vm66, 0, %v190
    %v193 = vmul.f32 %v191, %v191
    %v194 = vmul.f32 %v193, -0.001358992
    %v195 = vadd.f32 %v194, 0.041655596
    %v196 = vmul.f32 %v193, %v195
    %v197 = vadd.f32 %v196, -0.4999988
    %v198 = vmul.f32 %v193, %v197
    %v199 = vadd.f32 1.0, %v198
    %v200 = vmul.f32 %v191, %v191
    %v201 = vmul.f32 %v200, -0.00019511016
    %v202 = vadd.f32 %v201, 0.008332121
    %v203 = vmul.f32 %v200, %v202
    %v204 = vadd.f32 %v203, -0.16666654
    %v205 = vmul.f32 %v200, %v204
    %v206 = vadd.f32 %v205, 1.0
    %v207 = vmul.f32 %v206, %v191
    %vm208 = vweird.f32 %v64
    %v209 = vadd.s32 %v192, 3
    %v210 = vand.u32 %v209, 3
    %vm211 = vcmp.lt.s32.totalorder %v210, 2
    %vm212 = vcmp.eq.s32.totalorder %v210, 0
    %v213 = vxor.u32 %v207, 2147483648
    %v214 = vsel %vm212, %v199, %v213
    %vm215 = vcmp.eq.s32.totalorder %v210, 2
    %v216 = vxor.u32 %v199, 2147483648
    %v217 = vsel %vm215, %v216, %v207
    %v218 = vsel %vm211, %v214, %v217
    %v219 = vsel %vm208, nan, %v218
    %v221 = vperm.slane %v35, 0
    %223 = vmatpush.msra.mxu0 %v34
    %224 = vmatpush.msra.mxu0 %v33
    %225 = vmatpush.msra.mxu0 %v32
    %226 = vmatpush.msra.mxu0 %v31
    %227 = vmatpush.msra.mxu0 %v30
    %228 = vmatpush.msra.mxu0 %v29
    %229 = vmatpush.msra.mxu0 %v28
    %230 = vmatpush.msra.mxu0 %v27
    %231 = vmatpush.msra.mxu0 %v26
    %232 = vmatpush.msra.mxu0 %v25
    %233 = vmatpush.msra.mxu0 %v24
    %234 = vmatpush.msra.mxu0 %v23
    %235 = vmatpush.msra.mxu0 %v22
    %236 = vmatpush.msra.mxu0 %v21
    %237 = vmatpush.msra.mxu0 %v20
    %238 = vmatpush.msra.mxu0 %v19
    %239 = vmatmul.f32.gmra.mxu0 %v219
    %v240 = vpop.f32.mrf.mxu0
    %v241 = vadd.f32 %v221, %v240
    %242 = vdwg.mxu0
    %vm243 = vcmask 261120
    %244 = vst.msk [vmem:[#allocation2] sm:$0xff] %vm243, %v241
    // Predicated region
    $region18: #{tpu_custom_call.1} parent=1 // pred_check
      _
    $region19: #{tpu_custom_call.1} parent=1 // pred_check_branch
      %246 = sbr.rel (0) target = $region21
    $region20: #{tpu_custom_call.1} parent=1 // pred_region
      %248 = vsyncadd [#allocation3], 0
      %s250 = sshll.u32 [#allocation2], 4
      %s251 = int_to_ptr.vmem [resolvable:$true] %s250
      %s252 = sshll.u32 %s4, 4
      %s253 = int_to_ptr.hbm [resolvable:$true] %s252
      %255 = dma.vmem_to_hbm [thread:$0]  %s251, 128, %s253, [#allocation3]
    $region21: #{tpu_custom_call.1} parent=1 // pred_fallthru
      _
    // Predicated region
    $region22: #{tpu_custom_call.1} parent=1 // pred_check
      _
    $region23: #{tpu_custom_call.1} parent=1 // pred_check_branch
      %257 = sbr.rel (0) target = $region25
    $region24: #{tpu_custom_call.1} parent=1 // pred_region
      %259 = dma.done [#allocation3], 128
    $region25: #{tpu_custom_call.1} parent=1 // pred_fallthru
      _
    %260 = vsyncpa [#allocation3], 1

</llo_original>
